<compile_context>
chip_gen: v6e
topology: v6e:2x2x1
jax: 0.10.0
libtpu: 0.0.40
codegen_flags: <defaults>
</compile_context>

<pallas_src>
import functools

import jax
import jax.numpy as jnp
from jax import lax
from jax.experimental import pallas as pl
from jax.experimental.pallas import tpu as pltpu

H1, H2 = 512, 256          # fc1 / fc2 widths (fixed by the module)
LANE = 128                 # TPU lane width / padding target
_NEG_BIG = -1e30           # finite "-inf" (avoids 0 * -inf = nan)


def _round_up(x, m):
    return (x + m - 1) // m * m


# ----------------------------- kernel bodies --------------------------------

def _mlp_body(x_ref, w1_ref, w2_ref, w3_ref, b_ref, num_classes, c_pad):
    """fc1 -> ReLU -> fc2 -> ReLU -> fc3 -> masked softmax over padded classes."""
    x = x_ref[...].astype(jnp.bfloat16)              # f32 in HBM, cast in-VMEM
    b1 = b_ref[:, 0:H1]                              # (1, 512) f32
    b2 = b_ref[:, H1:H1 + H2]                        # (1, 256) f32
    b3 = b_ref[:, H1 + H2:H1 + H2 + c_pad]           # (1, c_pad) f32

    h1 = jnp.dot(x, w1_ref[...], preferred_element_type=jnp.float32) + b1
    h1 = jnp.maximum(h1, 0.0)
    h2 = jnp.dot(h1.astype(jnp.bfloat16), w2_ref[...],
                 preferred_element_type=jnp.float32) + b2
    h2 = jnp.maximum(h2, 0.0)
    logits = jnp.dot(h2.astype(jnp.bfloat16), w3_ref[...],
                     preferred_element_type=jnp.float32) + b3   # (TB, c_pad) f32

    col_ids = lax.broadcasted_iota(jnp.int32, logits.shape, 1)
    col_mask = col_ids < num_classes
    logits = jnp.where(col_mask, logits, _NEG_BIG)   # exclude pad classes

    m = jnp.max(logits, axis=-1, keepdims=True)
    e = jnp.exp(logits - m)
    denom = jnp.sum(e, axis=-1, keepdims=True)
    probs = e * pl.reciprocal(denom, approx=True)    # pad columns -> 0
    return probs, col_ids, col_mask


def _mlp2_infer_kernel(x_ref, w1_ref, w2_ref, w3_ref, b_ref, probs_ref,
                       *, num_classes, c_pad):
    probs, _, _ = _mlp_body(x_ref, w1_ref, w2_ref, w3_ref, b_ref,
                            num_classes, c_pad)
    probs_ref[...] = probs.astype(probs_ref.dtype)


def _mlp2_train_kernel(x_ref, lbl_ref, w1_ref, w2_ref, w3_ref, b_ref,
                       probs_ref, ploss_ref,
                       *, num_classes, c_pad, batch):
    i = pl.program_id(0)
    probs, col_ids, col_mask = _mlp_body(x_ref, w1_ref, w2_ref, w3_ref, b_ref,
                                         num_classes, c_pad)
    probs_ref[...] = probs.astype(probs_ref.dtype)

    # CrossEntropyLoss applied to the softmaxed output (matches PyTorch module):
    # log-softmax over the real classes only, then NLL at the label.
    z = jnp.where(col_mask, probs, _NEG_BIG)
    m2 = jnp.max(z, axis=-1, keepdims=True)
    lse = jnp.log(jnp.sum(jnp.exp(z - m2), axis=-1, keepdims=True)) + m2
    onehot = (col_ids == lbl_ref[...]).astype(jnp.float32)        # (TB, c_pad)
    logp_y = jnp.sum(onehot * (z - lse), axis=-1, keepdims=True)  # (TB, 1)

    tb = probs.shape[0]
    row_ids = i * tb + lax.broadcasted_iota(jnp.int32, (tb, 1), 0)
    valid = (row_ids < batch).astype(jnp.float32)                 # mask pad rows

    # Per-tile partial loss -> independent output block (batch axis "parallel").
    ploss_ref[0, 0] = jnp.sum(-logp_y * valid)


# ------------------------------- wrapper -------------------------------------

def mlp_model_forward(imgs, params, labels=None, tile_b=512):
    """Mirrors MLP_Model.forward (model_2 branch).

    imgs:   (B, H, W) float32
    labels: optional (B,) int class ids
    Returns softmax probs (B, num_classes) [f32], plus scalar loss if labels.
    """
    B = imgs.shape[0]
    x = imgs.reshape(B, imgs.shape[1] * imgs.shape[2]).astype(jnp.float32)
    nc = params["num_classes"]
    c_pad = params["c_pad"]
    d_pad = params["d_pad"]
    if x.shape[1] != d_pad:                          # keep MXU K dim full
        x = jnp.pad(x, ((0, 0), (0, d_pad - x.shape[1])))

    tb = min(tile_b, _round_up(B, 8))
    b_pad = _round_up(B, tb)
    if b_pad != B:
        x = jnp.pad(x, ((0, b_pad - B), (0, 0)))
    grid = (b_pad // tb,)

    resident = pl.Buffered(1)                        # grid-invariant operands
    x_spec = pl.BlockSpec((tb, d_pad), lambda i: (i, 0))
    w1_spec = pl.BlockSpec((d_pad, H1), lambda i: (0, 0), pipeline_mode=resident)
    w2_spec = pl.BlockSpec((H1, H2), lambda i: (0, 0), pipeline_mode=resident)
    w3_spec = pl.BlockSpec((H2, c_pad), lambda i: (0, 0), pipeline_mode=resident)
    b_spec = pl.BlockSpec((1, H1 + H2 + c_pad), lambda i: (0, 0),
                          pipeline_mode=resident)
    probs_spec = pl.BlockSpec((tb, c_pad), lambda i: (i, 0))

    if labels is None:
        probs_pad = pl.pallas_call(
            functools.partial(_mlp2_infer_kernel, num_classes=nc, c_pad=c_pad),
            out_shape=jax.ShapeDtypeStruct((b_pad, c_pad), jnp.bfloat16),
            grid_spec=pltpu.PrefetchScalarGridSpec(
                num_scalar_prefetch=0,
                grid=grid,
                in_specs=[x_spec, w1_spec, w2_spec, w3_spec, b_spec],
                out_specs=probs_spec),
            compiler_params=pltpu.CompilerParams(
                dimension_semantics=("parallel",)),
        )(x, params["w1"], params["w2"], params["w3"], params["b"])
        return probs_pad[:B, :nc].astype(jnp.float32)

    lbl = jnp.asarray(labels, jnp.int32).reshape(B, 1)
    if b_pad != B:
        lbl = jnp.pad(lbl, ((0, b_pad - B), (0, 0)))
    lbl_spec = pl.BlockSpec((tb, 1), lambda i: (i, 0))
    ploss_spec = pl.BlockSpec((1, 1), lambda i: (i, 0),
                              memory_space=pltpu.MemorySpace.SMEM)

    probs_pad, ploss = pl.pallas_call(
        functools.partial(_mlp2_train_kernel, num_classes=nc, c_pad=c_pad,
                          batch=B),
        out_shape=(jax.ShapeDtypeStruct((b_pad, c_pad), jnp.bfloat16),
                   jax.ShapeDtypeStruct((grid[0], 1), jnp.float32)),
        grid_spec=pltpu.PrefetchScalarGridSpec(
            num_scalar_prefetch=0,
            grid=grid,
            in_specs=[x_spec, lbl_spec, w1_spec, w2_spec, w3_spec, b_spec],
            out_specs=(probs_spec, ploss_spec)),
        compiler_params=pltpu.CompilerParams(
            dimension_semantics=("parallel",)),   # per-tile partials -> no race
    )(x, lbl, params["w1"], params["w2"], params["w3"], params["b"])

    probs = probs_pad[:B, :nc].astype(jnp.float32)
    loss = jnp.sum(ploss) * (1.0 / B)
    return probs, loss


# --------------------------- parameter handling ------------------------------

def init_params(key, in_dim, num_classes):
    """nn.Linear-style init (uniform +-1/sqrt(fan_in)); returns (kernel, ref)."""
    def linear(k, fan_in, fan_out):
        kw, kb = jax.random.split(k)
        bound = 1.0 / jnp.sqrt(jnp.float32(fan_in))
        w = jax.random.uniform(kw, (fan_in, fan_out), jnp.float32, -bound, bound)
        b = jax.random.uniform(kb, (1, fan_out), jnp.float32, -bound, bound)
        return w, b

    k1, k2, k3 = jax.random.split(key, 3)
    w1, b1 = linear(k1, in_dim, H1)
    w2, b2 = linear(k2, H1, H2)
    w3, b3 = linear(k3, H2, num_classes)
    ref = dict(w1=w1, b1=b1, w2=w2, b2=b2, w3=w3, b3=b3)

    c_pad = max(LANE, _round_up(num_classes, LANE))
    d_pad = _round_up(in_dim, LANE)
    w1p = jnp.pad(w1, ((0, d_pad - in_dim), (0, 0)))
    w3p = jnp.pad(w3, ((0, 0), (0, c_pad - num_classes)))
    b3p = jnp.pad(b3, ((0, 0), (0, c_pad - num_classes)))
    kernel = dict(
        w1=w1p.astype(jnp.bfloat16),
        w2=w2.astype(jnp.bfloat16),
        w3=w3p.astype(jnp.bfloat16),
        b=jnp.concatenate([b1, b2, b3p], axis=1).astype(jnp.float32),
        num_classes=num_classes,
        c_pad=c_pad,
        d_pad=d_pad,
    )
    return kernel, ref


def reference_forward(imgs, ref, labels=None):
    """Pure-JAX f32 reference of the PyTorch module (incl. double softmax CE)."""
    B = imgs.shape[0]
    x = imgs.reshape(B, -1)
    h1 = jnp.maximum(x @ ref["w1"] + ref["b1"], 0.0)
    h2 = jnp.maximum(h1 @ ref["w2"] + ref["b2"], 0.0)
    logits = h2 @ ref["w3"] + ref["b3"]
    probs = jax.nn.softmax(logits, axis=-1)
    if labels is None:
        return probs
    logp = jax.nn.log_softmax(probs, axis=-1)
    loss = -jnp.mean(logp[jnp.arange(B), labels])
    return probs, loss


# ------------------------------- main ---------------------------------------

if __name__ == "__main__":
    # config = {'model': 'model_2', 'image_W': 16, 'image_H': 16,
    #           'image_C': 1, 'num_classes': 10}
    B, Himg, Wimg, C, NUM_CLASSES = 8, 16, 16, 1, 10
    IN_DIM = C * Himg * Wimg

    key = jax.random.PRNGKey(0)
    k_img, k_lab, k_par = jax.random.split(key, 3)

    imgs = jax.random.normal(k_img, (B, Himg, Wimg), jnp.float32)
    labels = jax.random.randint(k_lab, (B,), 0, NUM_CLASSES, jnp.int32)
    kparams, rparams = init_params(k_par, IN_DIM, NUM_CLASSES)

    # with labels: (probs, loss)
    probs, loss = mlp_model_forward(imgs, kparams, labels)
    jax.block_until_ready((probs, loss))

    # without labels: probs only
    probs_only = mlp_model_forward(imgs, kparams)
    jax.block_until_ready(probs_only)

    ref_probs, ref_loss = reference_forward(imgs, rparams, labels)

    assert probs.shape == (B, NUM_CLASSES)
    assert probs_only.shape == (B, NUM_CLASSES)
    assert loss.shape == ()
    # softmax rows sum to ~1 (approx reciprocal + bf16 matmuls/store -> loose tol)
    assert bool(jnp.allclose(jnp.sum(probs, axis=-1), 1.0, atol=3e-2))
    # matches f32 reference within bf16 tolerance
    assert bool(jnp.allclose(probs, ref_probs, atol=3e-2))
    assert bool(jnp.allclose(probs_only, probs, atol=1e-5))
    assert bool(jnp.isfinite(loss)) and bool(jnp.abs(loss - ref_loss) < 5e-2)

    print("KERNEL_OK")
</pallas_src>

<mosaic_0001>
module attributes {stable_mosaic.version = 11 : i64} {
  func.func @_mlp2_train_kernel(%arg0: i32, %arg1: memref<8x256xf32, #tpu.memory_space<vmem>>, %arg2: memref<8x1xi32, #tpu.memory_space<vmem>>, %arg3: memref<256x512xbf16, #tpu.memory_space<vmem>>, %arg4: memref<512x256xbf16, #tpu.memory_space<vmem>>, %arg5: memref<256x128xbf16, #tpu.memory_space<vmem>>, %arg6: memref<1x896xf32, #tpu.memory_space<vmem>>, %arg7: memref<8x128xbf16, #tpu.memory_space<vmem>>, %arg8: memref<1x1xf32, #tpu.memory_space<smem>>) attributes {dimension_semantics = [#tpu.dimension_semantics<parallel>], iteration_bounds = array<i64: 1>, scalar_prefetch = 0 : i64, scratch_operands = 0 : i64, tpu.core_type = #tpu.core_type<tc>, window_params = [{transform_indices = @transform_0, window_bounds = array<i64: 8, 256>}, {transform_indices = @transform_1, window_bounds = array<i64: 8, 1>}, {pipeline_mode = #tpu.pipeline_mode<synchronous>, transform_indices = @transform_2, window_bounds = array<i64: 256, 512>}, {pipeline_mode = #tpu.pipeline_mode<synchronous>, transform_indices = @transform_3, window_bounds = array<i64: 512, 256>}, {pipeline_mode = #tpu.pipeline_mode<synchronous>, transform_indices = @transform_4, window_bounds = array<i64: 256, 128>}, {pipeline_mode = #tpu.pipeline_mode<synchronous>, transform_indices = @transform_5, window_bounds = array<i64: 1, 896>}, {transform_indices = @transform_6, window_bounds = array<i64: 8, 128>}, {transform_indices = @transform_7, window_bounds = array<i64: 1, 1>}]} {
    %c0 = arith.constant 0 : index
    %c0_0 = arith.constant 0 : index
    %0 = vector.load %arg1[%c0, %c0_0] : memref<8x256xf32, #tpu.memory_space<vmem>>, vector<8x256xf32>
    %1 = arith.truncf %0 : vector<8x256xf32> to vector<8x256xbf16>
    %c0_1 = arith.constant 0 : index
    %c0_2 = arith.constant 0 : index
    %2 = vector.load %arg6[%c0_1, %c0_2] : memref<1x896xf32, #tpu.memory_space<vmem>>, vector<1x512xf32>
    %c0_3 = arith.constant 0 : index
    %c512 = arith.constant 512 : index
    %3 = vector.load %arg6[%c0_3, %c512] : memref<1x896xf32, #tpu.memory_space<vmem>>, vector<1x256xf32>
    %c0_4 = arith.constant 0 : index
    %c768 = arith.constant 768 : index
    %4 = vector.load %arg6[%c0_4, %c768] : memref<1x896xf32, #tpu.memory_space<vmem>>, vector<1x128xf32>
    %c0_5 = arith.constant 0 : index
    %c0_6 = arith.constant 0 : index
    %5 = vector.load %arg3[%c0_5, %c0_6] : memref<256x512xbf16, #tpu.memory_space<vmem>>, vector<256x512xbf16>
    %cst = arith.constant dense<0.000000e+00> : vector<8x512xf32>
    %6 = tpu.matmul %1, %5, %cst {dimension_numbers = #tpu.dot_dimension_numbers<[1], [0], [0], [1], [0, 0, 1, 1], [], []>} : vector<8x256xbf16>, vector<256x512xbf16>, vector<8x512xf32> -> vector<8x512xf32>
    %7 = vector.broadcast %2 : vector<1x512xf32> to vector<8x512xf32>
    %8 = arith.addf %6, %7 : vector<8x512xf32>
    %cst_7 = arith.constant 0.000000e+00 : f32
    %9 = vector.broadcast %cst_7 : f32 to vector<8x512xf32>
    %10 = arith.maximumf %8, %9 : vector<8x512xf32>
    %11 = arith.truncf %10 : vector<8x512xf32> to vector<8x512xbf16>
    %c0_8 = arith.constant 0 : index
    %c0_9 = arith.constant 0 : index
    %12 = vector.load %arg4[%c0_8, %c0_9] : memref<512x256xbf16, #tpu.memory_space<vmem>>, vector<512x256xbf16>
    %cst_10 = arith.constant dense<0.000000e+00> : vector<8x256xf32>
    %13 = tpu.matmul %11, %12, %cst_10 {dimension_numbers = #tpu.dot_dimension_numbers<[1], [0], [0], [1], [0, 0, 1, 1], [], []>} : vector<8x512xbf16>, vector<512x256xbf16>, vector<8x256xf32> -> vector<8x256xf32>
    %14 = vector.broadcast %3 : vector<1x256xf32> to vector<8x256xf32>
    %15 = arith.addf %13, %14 : vector<8x256xf32>
    %cst_11 = arith.constant 0.000000e+00 : f32
    %16 = vector.broadcast %cst_11 : f32 to vector<8x256xf32>
    %17 = arith.maximumf %15, %16 : vector<8x256xf32>
    %18 = arith.truncf %17 : vector<8x256xf32> to vector<8x256xbf16>
    %c0_12 = arith.constant 0 : index
    %c0_13 = arith.constant 0 : index
    %19 = vector.load %arg5[%c0_12, %c0_13] : memref<256x128xbf16, #tpu.memory_space<vmem>>, vector<256x128xbf16>
    %cst_14 = arith.constant dense<0.000000e+00> : vector<8x128xf32>
    %20 = tpu.matmul %18, %19, %cst_14 {dimension_numbers = #tpu.dot_dimension_numbers<[1], [0], [0], [1], [0, 0, 1, 1], [], []>} : vector<8x256xbf16>, vector<256x128xbf16>, vector<8x128xf32> -> vector<8x128xf32>
    %21 = vector.broadcast %4 : vector<1x128xf32> to vector<8x128xf32>
    %22 = arith.addf %20, %21 : vector<8x128xf32>
    %23 = tpu.iota {dimensions = array<i32: 1>} : vector<8x128xi32>
    %c10_i32 = arith.constant 10 : i32
    %24 = vector.broadcast %c10_i32 : i32 to vector<8x128xi32>
    %25 = arith.cmpi slt, %23, %24 : vector<8x128xi32>
    %cst_15 = arith.constant -1.000000e+30 : f32
    %26 = vector.broadcast %cst_15 : f32 to vector<8x128xf32>
    %27 = arith.select %25, %22, %26 : vector<8x128xi1>, vector<8x128xf32>
    %cst_16 = arith.constant dense<0xFF800000> : vector<8xf32>
    %28 = vector.multi_reduction <maximumf>, %27, %cst_16 [1] : vector<8x128xf32> to vector<8xf32>
    %29 = vector.shape_cast %28 : vector<8xf32> to vector<8x1xf32>
    %30 = vector.broadcast %29 : vector<8x1xf32> to vector<8x128xf32>
    %31 = arith.subf %27, %30 : vector<8x128xf32>
    %32 = math.exp %31 : vector<8x128xf32>
    %cst_17 = arith.constant dense<0.000000e+00> : vector<8xf32>
    %33 = vector.multi_reduction <add>, %32, %cst_17 [1] : vector<8x128xf32> to vector<8xf32>
    %34 = vector.shape_cast %33 : vector<8xf32> to vector<8x1xf32>
    %35 = tpu.reciprocal %34 {approx = true} : vector<8x1xf32> -> vector<8x1xf32>
    %36 = vector.broadcast %35 : vector<8x1xf32> to vector<8x128xf32>
    %37 = arith.mulf %32, %36 : vector<8x128xf32>
    %38 = arith.truncf %37 : vector<8x128xf32> to vector<8x128xbf16>
    %c0_18 = arith.constant 0 : index
    %c0_19 = arith.constant 0 : index
    %39 = vector.load %arg7[%c0_18, %c0_19] : memref<8x128xbf16, #tpu.memory_space<vmem>>, vector<8x128xbf16>
    tpu.vector_store %arg7[%c0_18, %c0_19], %38 {strides = array<i32>} : memref<8x128xbf16, #tpu.memory_space<vmem>>, vector<8x128xbf16>,
    %cst_20 = arith.constant -1.000000e+30 : f32
    %40 = vector.broadcast %cst_20 : f32 to vector<8x128xf32>
    %41 = arith.select %25, %37, %40 : vector<8x128xi1>, vector<8x128xf32>
    %cst_21 = arith.constant dense<0xFF800000> : vector<8xf32>
    %42 = vector.multi_reduction <maximumf>, %41, %cst_21 [1] : vector<8x128xf32> to vector<8xf32>
    %43 = vector.shape_cast %42 : vector<8xf32> to vector<8x1xf32>
    %44 = vector.broadcast %43 : vector<8x1xf32> to vector<8x128xf32>
    %45 = arith.subf %41, %44 : vector<8x128xf32>
    %46 = math.exp %45 : vector<8x128xf32>
    %cst_22 = arith.constant dense<0.000000e+00> : vector<8xf32>
    %47 = vector.multi_reduction <add>, %46, %cst_22 [1] : vector<8x128xf32> to vector<8xf32>
    %48 = vector.shape_cast %47 : vector<8xf32> to vector<8x1xf32>
    %49 = math.log %48 : vector<8x1xf32>
    %50 = arith.addf %49, %43 : vector<8x1xf32>
    %c0_23 = arith.constant 0 : index
    %c0_24 = arith.constant 0 : index
    %51 = vector.load %arg2[%c0_23, %c0_24] : memref<8x1xi32, #tpu.memory_space<vmem>>, vector<8x1xi32>
    %52 = vector.broadcast %51 : vector<8x1xi32> to vector<8x128xi32>
    %53 = arith.cmpi eq, %23, %52 : vector<8x128xi32>
    %54 = arith.extui %53 : vector<8x128xi1> to vector<8x128xi32>
    %55 = arith.sitofp %54 : vector<8x128xi32> to vector<8x128xf32>
    %56 = vector.broadcast %50 : vector<8x1xf32> to vector<8x128xf32>
    %57 = arith.subf %41, %56 : vector<8x128xf32>
    %58 = arith.mulf %55, %57 : vector<8x128xf32>
    %cst_25 = arith.constant dense<0.000000e+00> : vector<8xf32>
    %59 = vector.multi_reduction <add>, %58, %cst_25 [1] : vector<8x128xf32> to vector<8xf32>
    %60 = vector.shape_cast %59 : vector<8xf32> to vector<8x1xf32>
    %c8_i32 = arith.constant 8 : i32
    %61 = arith.muli %arg0, %c8_i32 : i32
    %62 = tpu.iota {dimensions = array<i32: 0>} : vector<8x1xi32>
    %63 = vector.broadcast %61 : i32 to vector<8x1xi32>
    %64 = arith.addi %63, %62 : vector<8x1xi32>
    %c8_i32_26 = arith.constant 8 : i32
    %65 = vector.broadcast %c8_i32_26 : i32 to vector<8x1xi32>
    %66 = arith.cmpi slt, %64, %65 : vector<8x1xi32>
    %67 = arith.extui %66 : vector<8x1xi1> to vector<8x1xi32>
    %68 = arith.sitofp %67 : vector<8x1xi32> to vector<8x1xf32>
    %cst_27 = arith.constant 0.000000e+00 : f32
    %69 = vector.broadcast %cst_27 : f32 to vector<8x1xf32>
    %70 = arith.subf %69, %60 : vector<8x1xf32>
    %71 = arith.mulf %70, %68 : vector<8x1xf32>
    %72 = vector.shape_cast %71 : vector<8x1xf32> to vector<1x8x1xf32>
    %cst_28 = arith.constant dense<0.000000e+00> : vector<1xf32>
    %73 = vector.multi_reduction <add>, %72, %cst_28 [1, 2] : vector<1x8x1xf32> to vector<1xf32>
    %74 = vector.shape_cast %73 : vector<1xf32> to vector<1x1x1xf32>
    %75 = vector.extract %74[0, 0, 0] : f32 from vector<1x1x1xf32>
    %c0_29 = arith.constant 0 : index
    %c0_30 = arith.constant 0 : index
    %76 = memref.load %arg8[%c0_29, %c0_30] : memref<1x1xf32, #tpu.memory_space<smem>>
    memref.store %75, %arg8[%c0_29, %c0_30] : memref<1x1xf32, #tpu.memory_space<smem>>
    return
  }
  func.func @transform_0(%arg0: i32) -> (i32, i32) {
    %c0_i32 = arith.constant 0 : i32
    %c0_i32_0 = arith.constant 0 : i32
    return %arg0, %c0_i32 : i32, i32
  }
  func.func @transform_1(%arg0: i32) -> (i32, i32) {
    %c0_i32 = arith.constant 0 : i32
    %c0_i32_0 = arith.constant 0 : i32
    return %arg0, %c0_i32 : i32, i32
  }
  func.func @transform_2(%arg0: i32) -> (i32, i32) {
    %c0_i32 = arith.constant 0 : i32
    %c0_i32_0 = arith.constant 0 : i32
    %c0_i32_1 = arith.constant 0 : i32
    return %c0_i32, %c0_i32_0 : i32, i32
  }
  func.func @transform_3(%arg0: i32) -> (i32, i32) {
    %c0_i32 = arith.constant 0 : i32
    %c0_i32_0 = arith.constant 0 : i32
    %c0_i32_1 = arith.constant 0 : i32
    return %c0_i32, %c0_i32_0 : i32, i32
  }
  func.func @transform_4(%arg0: i32) -> (i32, i32) {
    %c0_i32 = arith.constant 0 : i32
    %c0_i32_0 = arith.constant 0 : i32
    %c0_i32_1 = arith.constant 0 : i32
    return %c0_i32, %c0_i32_0 : i32, i32
  }
  func.func @transform_5(%arg0: i32) -> (i32, i32) {
    %c0_i32 = arith.constant 0 : i32
    %c0_i32_0 = arith.constant 0 : i32
    %c0_i32_1 = arith.constant 0 : i32
    return %c0_i32, %c0_i32_0 : i32, i32
  }
  func.func @transform_6(%arg0: i32) -> (i32, i32) {
    %c0_i32 = arith.constant 0 : i32
    %c0_i32_0 = arith.constant 0 : i32
    return %arg0, %c0_i32 : i32, i32
  }
  func.func @transform_7(%arg0: i32) -> (i32, i32) {
    %c0_i32 = arith.constant 0 : i32
    %c0_i32_0 = arith.constant 0 : i32
    return %arg0, %c0_i32 : i32, i32
  }
}

</mosaic_0001>

<llo_original>
// kernel: tpu_custom_call.1
$region0: #{tpu_custom_call.1}
  #allocation0 [shape = 'u32[]', space=smem, size = 0x4, offset = 0x4, fixed_abs, tag = 'smem constant byte address 0x4 - core index']
  #allocation1 [shape = 'u32[144,128]{1,0:T(1,128)}', space=vmem, size = 0x12000, scoped, tag = 'internal scratch']
  %s0 = inlined_call_operand.hbm [shape: f32[8,256], index: 0, kind: input, shape index: {}]
  %s1 = inlined_call_operand.vmem [shape: s32[8,1], index: 1, kind: input, shape index: {}]
  %s2 = inlined_call_operand.hbm [shape: bf16[256,512], index: 2, kind: input, shape index: {}]
  %s3 = inlined_call_operand.hbm [shape: bf16[512,256], index: 3, kind: input, shape index: {}]
  %s4 = inlined_call_operand.hbm [shape: bf16[256,128], index: 4, kind: input, shape index: {}]
  %s5 = inlined_call_operand.vmem [shape: f32[1,896], index: 5, kind: input, shape index: {}]
  %s6 = inlined_call_operand.hbm [shape: bf16[8,128], index: 6, kind: output, shape index: {0}]
  %s7 = inlined_call_operand.hbm [shape: f32[1,1], index: 7, kind: output, shape index: {1}]
  %8 = xla_tuple %s6, %s7
  %s9 = sld [smem:[#allocation0]]
  $region58: #{tpu_custom_call.1} parent=0
    _
  %s11 = ssub.s32 1, %s9
  %s12 = scalar_select 0, %s11, %s9
  $region1: #{tpu_custom_call.1} parent=0
    #allocation2 [shape = 'u8[8192]{0}', space=vmem, size = 0x2000, scoped, tag = 'input window, operand 0, single buffered']
    #allocation3 [shape = 's32[1]{0}', space=sflag, size = 0x4, scoped, tag = 'scoped memory for tpu_custom_call.1']
    #allocation4 [shape = 's32[1]{0}', space=sflag, size = 0x4, scoped, tag = 'scoped memory for tpu_custom_call.1']
    #allocation5 [shape = 's32[1]{0}', space=sflag, size = 0x4, scoped, tag = 'scoped memory for tpu_custom_call.1']
    #allocation6 [shape = 'u8[262144]{0}', space=vmem, size = 0x40000, scoped, tag = 'input window, operand 2, single buffered']
    #allocation7 [shape = 's32[1]{0}', space=sflag, size = 0x4, scoped, tag = 'scoped memory for tpu_custom_call.1']
    #allocation8 [shape = 'u8[262144]{0}', space=vmem, size = 0x40000, scoped, tag = 'input window, operand 3, single buffered']
    #allocation9 [shape = 'u8[65536]{0}', space=vmem, size = 0x10000, scoped, tag = 'input window, operand 4, single buffered']
    #allocation10 [shape = 's32[1]{0}', space=sflag, size = 0x4, scoped, tag = 'scoped memory for tpu_custom_call.1']
    #allocation11 [shape = 'u8[2048]{0}', space=vmem, size = 0x800, scoped, tag = 'output window, operand 0, single buffered']
    #allocation12 [shape = 'u8[512]{0}', space=smem, size = 0x200, scoped, tag = 'output window, operand 1, single buffered']
    %13 = vsyncpa [#allocation3], 0
    %14 = vsyncpa [#allocation7], 0
    %15 = vsyncpa [#allocation10], 0
    %16 = vsyncpa [#allocation4], 0
    %17 = vsyncpa [#allocation5], 0
    // Predicated region
    $region2: #{tpu_custom_call.1} parent=1 // pred_check
      _
    $region3: #{tpu_custom_call.1} parent=1 // pred_check_branch
      %19 = sbr.rel (0) target = $region5
    $region4: #{tpu_custom_call.1} parent=1 // pred_region
      %s21 = ssub.s32 256, 256
      %22 = vsyncadd [#allocation3], %s21
      %s24 = sshll.u32 [#allocation2], 4
      %s25 = int_to_ptr.vmem [resolvable:$true] %s24
      %27 = dma.hbm_to_vmem [thread:$0]  %s0, 256, %s25, [#allocation3]
    $region5: #{tpu_custom_call.1} parent=1 // pred_fallthru
      _
    // Predicated region
    $region6: #{tpu_custom_call.1} parent=1 // pred_check
      _
    $region7: #{tpu_custom_call.1} parent=1 // pred_check_branch
      %29 = sbr.rel (0) target = $region9
    $region8: #{tpu_custom_call.1} parent=1 // pred_region
      _
    $region9: #{tpu_custom_call.1} parent=1 // pred_fallthru
      _
    // Predicated region
    $region10: #{tpu_custom_call.1} parent=1 // pred_check
      _
    $region11: #{tpu_custom_call.1} parent=1 // pred_check_branch
      %31 = sbr.rel (0) target = $region13
    $region12: #{tpu_custom_call.1} parent=1 // pred_region
      %s33 = ssub.s32 8192, 8192
      %34 = vsyncadd [#allocation7], %s33
      %s35 = sshll.u32 [#allocation6], 4
      %s36 = int_to_ptr.vmem [resolvable:$true] %s35
      %41 = dma.hbm_to_vmem [thread:$0]  %s2, 8192, %s36, [#allocation7], 256, 256, 16
    $region13: #{tpu_custom_call.1} parent=1 // pred_fallthru
      _
    // Predicated region
    $region14: #{tpu_custom_call.1} parent=1 // pred_check
      _
    $region15: #{tpu_custom_call.1} parent=1 // pred_check_branch
      %43 = sbr.rel (0) target = $region17
    $region16: #{tpu_custom_call.1} parent=1 // pred_region
      %s45 = ssub.s32 8192, 8192
      %46 = vsyncadd [#allocation7], %s45
      %s47 = sshll.u32 [#allocation8], 4
      %s48 = int_to_ptr.vmem [resolvable:$true] %s47
      %53 = dma.hbm_to_vmem [thread:$0]  %s3, 8192, %s48, [#allocation7], 128, 128, 8
    $region17: #{tpu_custom_call.1} parent=1 // pred_fallthru
      _
    // Predicated region
    $region18: #{tpu_custom_call.1} parent=1 // pred_check
      _
    $region19: #{tpu_custom_call.1} parent=1 // pred_check_branch
      %55 = sbr.rel (0) target = $region21
    $region20: #{tpu_custom_call.1} parent=1 // pred_region
      %s57 = ssub.s32 2048, 2048
      %58 = vsyncadd [#allocation10], %s57
      %s59 = sshll.u32 [#allocation9], 4
      %s60 = int_to_ptr.vmem [resolvable:$true] %s59
      %65 = dma.hbm_to_vmem [thread:$0]  %s4, 2048, %s60, [#allocation10], 64, 64, 4
    $region21: #{tpu_custom_call.1} parent=1 // pred_fallthru
      _
    // Predicated region
    $region22: #{tpu_custom_call.1} parent=1 // pred_check
      _
    $region23: #{tpu_custom_call.1} parent=1 // pred_check_branch
      %67 = sbr.rel (0) target = $region25
    $region24: #{tpu_custom_call.1} parent=1 // pred_region
      _
    $region25: #{tpu_custom_call.1} parent=1 // pred_fallthru
      _
    // Predicated region
    $region26: #{tpu_custom_call.1} parent=1 // pred_check
      _
    $region27: #{tpu_custom_call.1} parent=1 // pred_check_branch
      %69 = sbr.rel (0) target = $region29
    $region28: #{tpu_custom_call.1} parent=1 // pred_region
      %70 = dma.done [#allocation3], 256
    $region29: #{tpu_custom_call.1} parent=1 // pred_fallthru
      _
    // Predicated region
    $region30: #{tpu_custom_call.1} parent=1 // pred_check
      _
    $region31: #{tpu_custom_call.1} parent=1 // pred_check_branch
      %72 = sbr.rel (0) target = $region33
    $region32: #{tpu_custom_call.1} parent=1 // pred_region
      %73 = dma.done [#allocation7], 8192
    $region33: #{tpu_custom_call.1} parent=1 // pred_fallthru
      _
    // Predicated region
    $region34: #{tpu_custom_call.1} parent=1 // pred_check
      _
    $region35: #{tpu_custom_call.1} parent=1 // pred_check_branch
      %75 = sbr.rel (0) target = $region37
    $region36: #{tpu_custom_call.1} parent=1 // pred_region
      %76 = dma.done [#allocation7], 8192
    $region37: #{tpu_custom_call.1} parent=1 // pred_fallthru
      _
    // Predicated region
    $region38: #{tpu_custom_call.1} parent=1 // pred_check
      _
    $region39: #{tpu_custom_call.1} parent=1 // pred_check_branch
      %78 = sbr.rel (0) target = $region41
    $region40: #{tpu_custom_call.1} parent=1 // pred_region
      %79 = dma.done [#allocation10], 2048
    $region41: #{tpu_custom_call.1} parent=1 // pred_fallthru
      _
    %v81 = vld [vmem:[#allocation2] sm:$0xff]
    %v82 = vld [vmem:[#allocation2 + $0x8] sm:$0xff]
    %v83 = vpack.c.bf16 %v81, %v81
    %v84 = vpack.c.bf16 %v82, %v82
    %v85 = vld [vmem:[%s5] sm:$0xf]
    %v86 = vld [vmem:[%s5 + $0x4] sm:$0x3]
    %v87 = vld [vmem:[%s5 + $0x6] sm:$0x1]
    %v88 = vld [vmem:[#allocation6] sm:$0xff]
    %v89 = vld [vmem:[#allocation6 + $0x8] sm:$0xff]
    %v90 = vld [vmem:[#allocation6 + $0x10] sm:$0xff]
    %v91 = vld [vmem:[#allocation6 + $0x18] sm:$0xff]
    %v92 = vld [vmem:[#allocation6 + $0x20] sm:$0xff]
    %v93 = vld [vmem:[#allocation6 + $0x28] sm:$0xff]
    %v94 = vld [vmem:[#allocation6 + $0x30] sm:$0xff]
    %v95 = vld [vmem:[#allocation6 + $0x38] sm:$0xff]
    %v96 = vld [vmem:[#allocation6 + $0x40] sm:$0xff]
    %v97 = vld [vmem:[#allocation6 + $0x48] sm:$0xff]
    %v98 = vld [vmem:[#allocation6 + $0x50] sm:$0xff]
    %v99 = vld [vmem:[#allocation6 + $0x58] sm:$0xff]
    %v100 = vld [vmem:[#allocation6 + $0x60] sm:$0xff]
    %v101 = vld [vmem:[#allocation6 + $0x68] sm:$0xff]
    %v102 = vld [vmem:[#allocation6 + $0x70] sm:$0xff]
    %v103 = vld [vmem:[#allocation6 + $0x78] sm:$0xff]
    %v104 = vld [vmem:[#allocation6 + $0x80] sm:$0xff]
    %v105 = vld [vmem:[#allocation6 + $0x88] sm:$0xff]
    %v106 = vld [vmem:[#allocation6 + $0x90] sm:$0xff]
    %v107 = vld [vmem:[#allocation6 + $0x98] sm:$0xff]
    %v108 = vld [vmem:[#allocation6 + $0xa0] sm:$0xff]
    %v109 = vld [vmem:[#allocation6 + $0xa8] sm:$0xff]
    %v110 = vld [vmem:[#allocation6 + $0xb0] sm:$0xff]
    %v111 = vld [vmem:[#allocation6 + $0xb8] sm:$0xff]
    %v112 = vld [vmem:[#allocation6 + $0xc0] sm:$0xff]
    %v113 = vld [vmem:[#allocation6 + $0xc8] sm:$0xff]
    %v114 = vld [vmem:[#allocation6 + $0xd0] sm:$0xff]
    %v115 = vld [vmem:[#allocation6 + $0xd8] sm:$0xff]
    %v116 = vld [vmem:[#allocation6 + $0xe0] sm:$0xff]
    %v117 = vld [vmem:[#allocation6 + $0xe8] sm:$0xff]
    %v118 = vld [vmem:[#allocation6 + $0xf0] sm:$0xff]
    %v119 = vld [vmem:[#allocation6 + $0xf8] sm:$0xff]
    %v120 = vld [vmem:[#allocation6 + $0x100] sm:$0xff]
    %v121 = vld [vmem:[#allocation6 + $0x108] sm:$0xff]
    %v122 = vld [vmem:[#allocation6 + $0x110] sm:$0xff]
    %v123 = vld [vmem:[#allocation6 + $0x118] sm:$0xff]
    %v124 = vld [vmem:[#allocation6 + $0x120] sm:$0xff]
    %v125 = vld [vmem:[#allocation6 + $0x128] sm:$0xff]
    %v126 = vld [vmem:[#allocation6 + $0x130] sm:$0xff]
    %v127 = vld [vmem:[#allocation6 + $0x138] sm:$0xff]
    %v128 = vld [vmem:[#allocation6 + $0x140] sm:$0xff]
    %v129 = vld [vmem:[#allocation6 + $0x148] sm:$0xff]
    %v130 = vld [vmem:[#allocation6 + $0x150] sm:$0xff]
    %v131 = vld [vmem:[#allocation6 + $0x158] sm:$0xff]
    %v132 = vld [vmem:[#allocation6 + $0x160] sm:$0xff]
    %v133 = vld [vmem:[#allocation6 + $0x168] sm:$0xff]
    %v134 = vld [vmem:[#allocation6 + $0x170] sm:$0xff]
    %v135 = vld [vmem:[#allocation6 + $0x178] sm:$0xff]
    %v136 = vld [vmem:[#allocation6 + $0x180] sm:$0xff]
    %v137 = vld [vmem:[#allocation6 + $0x188] sm:$0xff]
    %v138 = vld [vmem:[#allocation6 + $0x190] sm:$0xff]
    %v139 = vld [vmem:[#allocation6 + $0x198] sm:$0xff]
    %v140 = vld [vmem:[#allocation6 + $0x1a0] sm:$0xff]
    %v141 = vld [vmem:[#allocation6 + $0x1a8] sm:$0xff]
    %v142 = vld [vmem:[#allocation6 + $0x1b0] sm:$0xff]
    %v143 = vld [vmem:[#allocation6 + $0x1b8] sm:$0xff]
    %v144 = vld [vmem:[#allocation6 + $0x1c0] sm:$0xff]
    %v145 = vld [vmem:[#allocation6 + $0x1c8] sm:$0xff]
    %v146 = vld [vmem:[#allocation6 + $0x1d0] sm:$0xff]
    %v147 = vld [vmem:[#allocation6 + $0x1d8] sm:$0xff]
    %v148 = vld [vmem:[#allocation6 + $0x1e0] sm:$0xff]
    %v149 = vld [vmem:[#allocation6 + $0x1e8] sm:$0xff]
    %v150 = vld [vmem:[#allocation6 + $0x1f0] sm:$0xff]
    %v151 = vld [vmem:[#allocation6 + $0x1f8] sm:$0xff]
    %v153 = vlaneseq
    %v154 = vshrl.u32 %v153, 7
    %v155 = vsub.s32 0, %v154
    %v156 = vrot.slane %v85, %v155
    %v157 = vlaneseq
    %v158 = vshrl.u32 %v157, 7
    %v159 = vsub.s32 1, %v158
    %v160 = vrot.slane %v85, %v159
    %v161 = vlaneseq
    %v162 = vshrl.u32 %v161, 7
    %v163 = vsub.s32 2, %v162
    %v164 = vrot.slane %v85, %v163
    %v165 = vlaneseq
    %v166 = vshrl.u32 %v165, 7
    %v167 = vsub.s32 3, %v166
    %v168 = vrot.slane %v85, %v167
    %v237 = vunpack.c.l.b16 %v88
    %v238 = vunpack.c.h.b16 %v88
    %v239 = vunpack.c.l.b16 %v89
    %v240 = vunpack.c.h.b16 %v89
    %v241 = vunpack.c.l.b16 %v90
    %v242 = vunpack.c.h.b16 %v90
    %v243 = vunpack.c.l.b16 %v91
    %v244 = vunpack.c.h.b16 %v91
    %v245 = vunpack.c.l.b16 %v92
    %v246 = vunpack.c.h.b16 %v92
    %v247 = vunpack.c.l.b16 %v93
    %v248 = vunpack.c.h.b16 %v93
    %v249 = vunpack.c.l.b16 %v94
    %v250 = vunpack.c.h.b16 %v94
    %v251 = vunpack.c.l.b16 %v95
    %v252 = vunpack.c.h.b16 %v95
    %v253 = vunpack.c.l.b16 %v96
    %v254 = vunpack.c.h.b16 %v96
    %v255 = vunpack.c.l.b16 %v97
    %v256 = vunpack.c.h.b16 %v97
    %v257 = vunpack.c.l.b16 %v98
    %v258 = vunpack.c.h.b16 %v98
    %v259 = vunpack.c.l.b16 %v99
    %v260 = vunpack.c.h.b16 %v99
    %v261 = vunpack.c.l.b16 %v100
    %v262 = vunpack.c.h.b16 %v100
    %v263 = vunpack.c.l.b16 %v101
    %v264 = vunpack.c.h.b16 %v101
    %v265 = vunpack.c.l.b16 %v102
    %v266 = vunpack.c.h.b16 %v102
    %v267 = vunpack.c.l.b16 %v103
    %v268 = vunpack.c.h.b16 %v103
    %v269 = vunpack.c.l.b16 %v104
    %v270 = vunpack.c.h.b16 %v104
    %v271 = vunpack.c.l.b16 %v105
    %v272 = vunpack.c.h.b16 %v105
    %v273 = vunpack.c.l.b16 %v106
    %v274 = vunpack.c.h.b16 %v106
    %v275 = vunpack.c.l.b16 %v107
    %v276 = vunpack.c.h.b16 %v107
    %v277 = vunpack.c.l.b16 %v108
    %v278 = vunpack.c.h.b16 %v108
    %v279 = vunpack.c.l.b16 %v109
    %v280 = vunpack.c.h.b16 %v109
    %v281 = vunpack.c.l.b16 %v110
    %v282 = vunpack.c.h.b16 %v110
    %v283 = vunpack.c.l.b16 %v111
    %v284 = vunpack.c.h.b16 %v111
    %v285 = vunpack.c.l.b16 %v112
    %v286 = vunpack.c.h.b16 %v112
    %v287 = vunpack.c.l.b16 %v113
    %v288 = vunpack.c.h.b16 %v113
    %v289 = vunpack.c.l.b16 %v114
    %v290 = vunpack.c.h.b16 %v114
    %v291 = vunpack.c.l.b16 %v115
    %v292 = vunpack.c.h.b16 %v115
    %v293 = vunpack.c.l.b16 %v116
    %v294 = vunpack.c.h.b16 %v116
    %v295 = vunpack.c.l.b16 %v117
    %v296 = vunpack.c.h.b16 %v117
    %v297 = vunpack.c.l.b16 %v118
    %v298 = vunpack.c.h.b16 %v118
    %v299 = vunpack.c.l.b16 %v119
    %v300 = vunpack.c.h.b16 %v119
    %v301 = vunpack.c.l.b16 %v120
    %v302 = vunpack.c.h.b16 %v120
    %v303 = vunpack.c.l.b16 %v121
    %v304 = vunpack.c.h.b16 %v121
    %v305 = vunpack.c.l.b16 %v122
    %v306 = vunpack.c.h.b16 %v122
    %v307 = vunpack.c.l.b16 %v123
    %v308 = vunpack.c.h.b16 %v123
    %v309 = vunpack.c.l.b16 %v124
    %v310 = vunpack.c.h.b16 %v124
    %v311 = vunpack.c.l.b16 %v125
    %v312 = vunpack.c.h.b16 %v125
    %v313 = vunpack.c.l.b16 %v126
    %v314 = vunpack.c.h.b16 %v126
    %v315 = vunpack.c.l.b16 %v127
    %v316 = vunpack.c.h.b16 %v127
    %v317 = vunpack.c.l.b16 %v128
    %v318 = vunpack.c.h.b16 %v128
    %v319 = vunpack.c.l.b16 %v129
    %v320 = vunpack.c.h.b16 %v129
    %v321 = vunpack.c.l.b16 %v130
    %v322 = vunpack.c.h.b16 %v130
    %v323 = vunpack.c.l.b16 %v131
    %v324 = vunpack.c.h.b16 %v131
    %v325 = vunpack.c.l.b16 %v132
    %v326 = vunpack.c.h.b16 %v132
    %v327 = vunpack.c.l.b16 %v133
    %v328 = vunpack.c.h.b16 %v133
    %v329 = vunpack.c.l.b16 %v134
    %v330 = vunpack.c.h.b16 %v134
    %v331 = vunpack.c.l.b16 %v135
    %v332 = vunpack.c.h.b16 %v135
    %v333 = vunpack.c.l.b16 %v136
    %v334 = vunpack.c.h.b16 %v136
    %v335 = vunpack.c.l.b16 %v137
    %v336 = vunpack.c.h.b16 %v137
    %v337 = vunpack.c.l.b16 %v138
    %v338 = vunpack.c.h.b16 %v138
    %v339 = vunpack.c.l.b16 %v139
    %v340 = vunpack.c.h.b16 %v139
    %v341 = vunpack.c.l.b16 %v140
    %v342 = vunpack.c.h.b16 %v140
    %v343 = vunpack.c.l.b16 %v141
    %v344 = vunpack.c.h.b16 %v141
    %v345 = vunpack.c.l.b16 %v142
    %v346 = vunpack.c.h.b16 %v142
    %v347 = vunpack.c.l.b16 %v143
    %v348 = vunpack.c.h.b16 %v143
    %v349 = vunpack.c.l.b16 %v144
    %v350 = vunpack.c.h.b16 %v144
    %v351 = vunpack.c.l.b16 %v145
    %v352 = vunpack.c.h.b16 %v145
    %v353 = vunpack.c.l.b16 %v146
    %v354 = vunpack.c.h.b16 %v146
    %v355 = vunpack.c.l.b16 %v147
    %v356 = vunpack.c.h.b16 %v147
    %v357 = vunpack.c.l.b16 %v148
    %v358 = vunpack.c.h.b16 %v148
    %v359 = vunpack.c.l.b16 %v149
    %v360 = vunpack.c.h.b16 %v149
    %v361 = vunpack.c.l.b16 %v150
    %v362 = vunpack.c.h.b16 %v150
    %v363 = vunpack.c.l.b16 %v151
    %v364 = vunpack.c.h.b16 %v151
    %v365 = vpack.c.b16 %v241, %v237
    %v366 = vpack.c.b16 %v242, %v238
    %v367 = vpack.c.b16 %v243, %v239
    %v368 = vpack.c.b16 %v244, %v240
    %v369 = vpack.c.b16 %v249, %v245
    %v370 = vpack.c.b16 %v250, %v246
    %v371 = vpack.c.b16 %v251, %v247
    %v372 = vpack.c.b16 %v252, %v248
    %v373 = vpack.c.b16 %v257, %v253
    %v374 = vpack.c.b16 %v258, %v254
    %v375 = vpack.c.b16 %v259, %v255
    %v376 = vpack.c.b16 %v260, %v256
    %v377 = vpack.c.b16 %v265, %v261
    %v378 = vpack.c.b16 %v266, %v262
    %v379 = vpack.c.b16 %v267, %v263
    %v380 = vpack.c.b16 %v268, %v264
    %v381 = vpack.c.b16 %v273, %v269
    %v382 = vpack.c.b16 %v274, %v270
    %v383 = vpack.c.b16 %v275, %v271
    %v384 = vpack.c.b16 %v276, %v272
    %v385 = vpack.c.b16 %v281, %v277
    %v386 = vpack.c.b16 %v282, %v278
    %v387 = vpack.c.b16 %v283, %v279
    %v388 = vpack.c.b16 %v284, %v280
    %v389 = vpack.c.b16 %v289, %v285
    %v390 = vpack.c.b16 %v290, %v286
    %v391 = vpack.c.b16 %v291, %v287
    %v392 = vpack.c.b16 %v292, %v288
    %v393 = vpack.c.b16 %v297, %v293
    %v394 = vpack.c.b16 %v298, %v294
    %v395 = vpack.c.b16 %v299, %v295
    %v396 = vpack.c.b16 %v300, %v296
    %v397 = vpack.c.b16 %v305, %v301
    %v398 = vpack.c.b16 %v306, %v302
    %v399 = vpack.c.b16 %v307, %v303
    %v400 = vpack.c.b16 %v308, %v304
    %v401 = vpack.c.b16 %v313, %v309
    %v402 = vpack.c.b16 %v314, %v310
    %v403 = vpack.c.b16 %v315, %v311
    %v404 = vpack.c.b16 %v316, %v312
    %v405 = vpack.c.b16 %v321, %v317
    %v406 = vpack.c.b16 %v322, %v318
    %v407 = vpack.c.b16 %v323, %v319
    %v408 = vpack.c.b16 %v324, %v320
    %v409 = vpack.c.b16 %v329, %v325
    %v410 = vpack.c.b16 %v330, %v326
    %v411 = vpack.c.b16 %v331, %v327
    %v412 = vpack.c.b16 %v332, %v328
    %v413 = vpack.c.b16 %v337, %v333
    %v414 = vpack.c.b16 %v338, %v334
    %v415 = vpack.c.b16 %v339, %v335
    %v416 = vpack.c.b16 %v340, %v336
    %v417 = vpack.c.b16 %v345, %v341
    %v418 = vpack.c.b16 %v346, %v342
    %v419 = vpack.c.b16 %v347, %v343
    %v420 = vpack.c.b16 %v348, %v344
    %v421 = vpack.c.b16 %v353, %v349
    %v422 = vpack.c.b16 %v354, %v350
    %v423 = vpack.c.b16 %v355, %v351
    %v424 = vpack.c.b16 %v356, %v352
    %v425 = vpack.c.b16 %v361, %v357
    %v426 = vpack.c.b16 %v362, %v358
    %v427 = vpack.c.b16 %v363, %v359
    %v428 = vpack.c.b16 %v364, %v360
    %493 = vmatprep.subr.bf16.mxu0 %v394
    %494 = vmatpush1.bf16.msra.mxu0 %v393
    %495 = vmatprep.subr.bf16.mxu0 %v390
    %496 = vmatpush1.bf16.msra.mxu0 %v389
    %497 = vmatprep.subr.bf16.mxu0 %v386
    %498 = vmatpush1.bf16.msra.mxu0 %v385
    %499 = vmatprep.subr.bf16.mxu0 %v382
    %500 = vmatpush1.bf16.msra.mxu0 %v381
    %501 = vmatprep.subr.bf16.mxu0 %v378
    %502 = vmatpush1.bf16.msra.mxu0 %v377
    %503 = vmatprep.subr.bf16.mxu0 %v374
    %504 = vmatpush1.bf16.msra.mxu0 %v373
    %505 = vmatprep.subr.bf16.mxu0 %v370
    %506 = vmatpush1.bf16.msra.mxu0 %v369
    %507 = vmatprep.subr.bf16.mxu0 %v366
    %508 = vmatpush1.bf16.msra.mxu0 %v365
    %509 = vmatprep.subr.bf16.mxu0 %v426
    %510 = vmatpush2.bf16.msra.mxu0 %v425
    %511 = vmatprep.subr.bf16.mxu0 %v422
    %512 = vmatpush2.bf16.msra.mxu0 %v421
    %513 = vmatprep.subr.bf16.mxu0 %v418
    %514 = vmatpush2.bf16.msra.mxu0 %v417
    %515 = vmatprep.subr.bf16.mxu0 %v414
    %516 = vmatpush2.bf16.msra.mxu0 %v413
    %517 = vmatprep.subr.bf16.mxu0 %v410
    %518 = vmatpush2.bf16.msra.mxu0 %v409
    %519 = vmatprep.subr.bf16.mxu0 %v406
    %520 = vmatpush2.bf16.msra.mxu0 %v405
    %521 = vmatprep.subr.bf16.mxu0 %v402
    %522 = vmatpush2.bf16.msra.mxu0 %v401
    %523 = vmatprep.subr.bf16.mxu0 %v398
    %524 = vmatpush2.bf16.msra.mxu0 %v397
    %525 = vmatprep.mubr.bf16.mxu0 %v84
    %526 = vmatmul.mubr.bf16.gmra.mxu0 %v83
    %v527 = vpop.f32.mrf.mxu0
    %v528 = vadd.f32 %v156, %v527
    %v529 = vpop.f32.mrf.mxu0
    %v530 = vadd.f32 %v160, %v529
    %v531 = vpop.f32.mrf.mxu0
    %v532 = vpop.f32.mrf.mxu0
    %533 = vdwg.mxu0
    %534 = vmatprep.subr.bf16.mxu0 %v396
    %535 = vmatpush1.bf16.msra.mxu0 %v395
    %536 = vmatprep.subr.bf16.mxu0 %v392
    %537 = vmatpush1.bf16.msra.mxu0 %v391
    %538 = vmatprep.subr.bf16.mxu0 %v388
    %539 = vmatpush1.bf16.msra.mxu0 %v387
    %540 = vmatprep.subr.bf16.mxu0 %v384
    %541 = vmatpush1.bf16.msra.mxu0 %v383
    %542 = vmatprep.subr.bf16.mxu0 %v380
    %543 = vmatpush1.bf16.msra.mxu0 %v379
    %544 = vmatprep.subr.bf16.mxu0 %v376
    %545 = vmatpush1.bf16.msra.mxu0 %v375
    %546 = vmatprep.subr.bf16.mxu0 %v372
    %547 = vmatpush1.bf16.msra.mxu0 %v371
    %548 = vmatprep.subr.bf16.mxu0 %v368
    %549 = vmatpush1.bf16.msra.mxu0 %v367
    %550 = vmatprep.subr.bf16.mxu0 %v428
    %551 = vmatpush2.bf16.msra.mxu0 %v427
    %552 = vmatprep.subr.bf16.mxu0 %v424
    %553 = vmatpush2.bf16.msra.mxu0 %v423
    %554 = vmatprep.subr.bf16.mxu0 %v420
    %555 = vmatpush2.bf16.msra.mxu0 %v419
    %556 = vmatprep.subr.bf16.mxu0 %v416
    %557 = vmatpush2.bf16.msra.mxu0 %v415
    %558 = vmatprep.subr.bf16.mxu0 %v412
    %559 = vmatpush2.bf16.msra.mxu0 %v411
    %560 = vmatprep.subr.bf16.mxu0 %v408
    %561 = vmatpush2.bf16.msra.mxu0 %v407
    %562 = vmatprep.subr.bf16.mxu0 %v404
    %563 = vmatpush2.bf16.msra.mxu0 %v403
    %564 = vmatprep.subr.bf16.mxu0 %v400
    %565 = vmatpush2.bf16.msra.mxu0 %v399
    %566 = vmatprep.mubr.bf16.mxu0 %v84
    %567 = vmatmul.mubr.bf16.gmra.mxu0 %v83
    %v568 = vpop.f32.mrf.mxu0
    %v569 = vadd.f32 %v164, %v568
    %v570 = vpop.f32.mrf.mxu0
    %v571 = vadd.f32 %v168, %v570
    %v572 = vpop.f32.mrf.mxu0
    %v573 = vpop.f32.mrf.mxu0
    %574 = vdwg.mxu0
    %v575 = vmax.f32 %v528, 0.0
    %v576 = vmax.f32 %v530, 0.0
    %v577 = vmax.f32 %v569, 0.0
    %v578 = vmax.f32 %v571, 0.0
    %v579 = vpack.c.bf16 %v575, %v575
    %v580 = vpack.c.bf16 %v576, %v576
    %v581 = vpack.c.bf16 %v577, %v577
    %v582 = vpack.c.bf16 %v578, %v578
    %v583 = vld [vmem:[#allocation8] sm:$0xff]
    %v584 = vld [vmem:[#allocation8 + $0x8] sm:$0xff]
    %v585 = vld [vmem:[#allocation8 + $0x10] sm:$0xff]
    %v586 = vld [vmem:[#allocation8 + $0x18] sm:$0xff]
    %v587 = vld [vmem:[#allocation8 + $0x20] sm:$0xff]
    %v588 = vld [vmem:[#allocation8 + $0x28] sm:$0xff]
    %v589 = vld [vmem:[#allocation8 + $0x30] sm:$0xff]
    %v590 = vld [vmem:[#allocation8 + $0x38] sm:$0xff]
    %v591 = vld [vmem:[#allocation8 + $0x40] sm:$0xff]
    %v592 = vld [vmem:[#allocation8 + $0x48] sm:$0xff]
    %v593 = vld [vmem:[#allocation8 + $0x50] sm:$0xff]
    %v594 = vld [vmem:[#allocation8 + $0x58] sm:$0xff]
    %v595 = vld [vmem:[#allocation8 + $0x60] sm:$0xff]
    %v596 = vld [vmem:[#allocation8 + $0x68] sm:$0xff]
    %v597 = vld [vmem:[#allocation8 + $0x70] sm:$0xff]
    %v598 = vld [vmem:[#allocation8 + $0x78] sm:$0xff]
    %v599 = vld [vmem:[#allocation8 + $0x80] sm:$0xff]
    %v600 = vld [vmem:[#allocation8 + $0x88] sm:$0xff]
    %v601 = vld [vmem:[#allocation8 + $0x90] sm:$0xff]
    %v602 = vld [vmem:[#allocation8 + $0x98] sm:$0xff]
    %v603 = vld [vmem:[#allocation8 + $0xa0] sm:$0xff]
    %v604 = vld [vmem:[#allocation8 + $0xa8] sm:$0xff]
    %v605 = vld [vmem:[#allocation8 + $0xb0] sm:$0xff]
    %v606 = vld [vmem:[#allocation8 + $0xb8] sm:$0xff]
    %v607 = vld [vmem:[#allocation8 + $0xc0] sm:$0xff]
    %v608 = vld [vmem:[#allocation8 + $0xc8] sm:$0xff]
    %v609 = vld [vmem:[#allocation8 + $0xd0] sm:$0xff]
    %v610 = vld [vmem:[#allocation8 + $0xd8] sm:$0xff]
    %v611 = vld [vmem:[#allocation8 + $0xe0] sm:$0xff]
    %v612 = vld [vmem:[#allocation8 + $0xe8] sm:$0xff]
    %v613 = vld [vmem:[#allocation8 + $0xf0] sm:$0xff]
    %v614 = vld [vmem:[#allocation8 + $0xf8] sm:$0xff]
    %v615 = vld [vmem:[#allocation8 + $0x100] sm:$0xff]
    %v616 = vld [vmem:[#allocation8 + $0x108] sm:$0xff]
    %v617 = vld [vmem:[#allocation8 + $0x110] sm:$0xff]
    %v618 = vld [vmem:[#allocation8 + $0x118] sm:$0xff]
    %v619 = vld [vmem:[#allocation8 + $0x120] sm:$0xff]
    %v620 = vld [vmem:[#allocation8 + $0x128] sm:$0xff]
    %v621 = vld [vmem:[#allocation8 + $0x130] sm:$0xff]
    %v622 = vld [vmem:[#allocation8 + $0x138] sm:$0xff]
    %v623 = vld [vmem:[#allocation8 + $0x140] sm:$0xff]
    %v624 = vld [vmem:[#allocation8 + $0x148] sm:$0xff]
    %v625 = vld [vmem:[#allocation8 + $0x150] sm:$0xff]
    %v626 = vld [vmem:[#allocation8 + $0x158] sm:$0xff]
    %v627 = vld [vmem:[#allocation8 + $0x160] sm:$0xff]
    %v628 = vld [vmem:[#allocation8 + $0x168] sm:$0xff]
    %v629 = vld [vmem:[#allocation8 + $0x170] sm:$0xff]
    %v630 = vld [vmem:[#allocation8 + $0x178] sm:$0xff]
    %v631 = vld [vmem:[#allocation8 + $0x180] sm:$0xff]
    %v632 = vld [vmem:[#allocation8 + $0x188] sm:$0xff]
    %v633 = vld [vmem:[#allocation8 + $0x190] sm:$0xff]
    %v634 = vld [vmem:[#allocation8 + $0x198] sm:$0xff]
    %v635 = vld [vmem:[#allocation8 + $0x1a0] sm:$0xff]
    %v636 = vld [vmem:[#allocation8 + $0x1a8] sm:$0xff]
    %v637 = vld [vmem:[#allocation8 + $0x1b0] sm:$0xff]
    %v638 = vld [vmem:[#allocation8 + $0x1b8] sm:$0xff]
    %v639 = vld [vmem:[#allocation8 + $0x1c0] sm:$0xff]
    %v640 = vld [vmem:[#allocation8 + $0x1c8] sm:$0xff]
    %v641 = vld [vmem:[#allocation8 + $0x1d0] sm:$0xff]
    %v642 = vld [vmem:[#allocation8 + $0x1d8] sm:$0xff]
    %v643 = vld [vmem:[#allocation8 + $0x1e0] sm:$0xff]
    %v644 = vld [vmem:[#allocation8 + $0x1e8] sm:$0xff]
    %v645 = vld [vmem:[#allocation8 + $0x1f0] sm:$0xff]
    %v646 = vld [vmem:[#allocation8 + $0x1f8] sm:$0xff]
    %v648 = vlaneseq
    %v649 = vshrl.u32 %v648, 7
    %v650 = vsub.s32 0, %v649
    %v651 = vrot.slane %v86, %v650
    %v652 = vlaneseq
    %v653 = vshrl.u32 %v652, 7
    %v654 = vsub.s32 1, %v653
    %v655 = vrot.slane %v86, %v654
    %v722 = vunpack.c.l.b16 %v583
    %v723 = vunpack.c.h.b16 %v583
    %v724 = vunpack.c.l.b16 %v584
    %v725 = vunpack.c.h.b16 %v584
    %v726 = vunpack.c.l.b16 %v585
    %v727 = vunpack.c.h.b16 %v585
    %v728 = vunpack.c.l.b16 %v586
    %v729 = vunpack.c.h.b16 %v586
    %v730 = vunpack.c.l.b16 %v587
    %v731 = vunpack.c.h.b16 %v587
    %v732 = vunpack.c.l.b16 %v588
    %v733 = vunpack.c.h.b16 %v588
    %v734 = vunpack.c.l.b16 %v589
    %v735 = vunpack.c.h.b16 %v589
    %v736 = vunpack.c.l.b16 %v590
    %v737 = vunpack.c.h.b16 %v590
    %v738 = vunpack.c.l.b16 %v591
    %v739 = vunpack.c.h.b16 %v591
    %v740 = vunpack.c.l.b16 %v592
    %v741 = vunpack.c.h.b16 %v592
    %v742 = vunpack.c.l.b16 %v593
    %v743 = vunpack.c.h.b16 %v593
    %v744 = vunpack.c.l.b16 %v594
    %v745 = vunpack.c.h.b16 %v594
    %v746 = vunpack.c.l.b16 %v595
    %v747 = vunpack.c.h.b16 %v595
    %v748 = vunpack.c.l.b16 %v596
    %v749 = vunpack.c.h.b16 %v596
    %v750 = vunpack.c.l.b16 %v597
    %v751 = vunpack.c.h.b16 %v597
    %v752 = vunpack.c.l.b16 %v598
    %v753 = vunpack.c.h.b16 %v598
    %v754 = vunpack.c.l.b16 %v599
    %v755 = vunpack.c.h.b16 %v599
    %v756 = vunpack.c.l.b16 %v600
    %v757 = vunpack.c.h.b16 %v600
    %v758 = vunpack.c.l.b16 %v601
    %v759 = vunpack.c.h.b16 %v601
    %v760 = vunpack.c.l.b16 %v602
    %v761 = vunpack.c.h.b16 %v602
    %v762 = vunpack.c.l.b16 %v603
    %v763 = vunpack.c.h.b16 %v603
    %v764 = vunpack.c.l.b16 %v604
    %v765 = vunpack.c.h.b16 %v604
    %v766 = vunpack.c.l.b16 %v605
    %v767 = vunpack.c.h.b16 %v605
    %v768 = vunpack.c.l.b16 %v606
    %v769 = vunpack.c.h.b16 %v606
    %v770 = vunpack.c.l.b16 %v607
    %v771 = vunpack.c.h.b16 %v607
    %v772 = vunpack.c.l.b16 %v608
    %v773 = vunpack.c.h.b16 %v608
    %v774 = vunpack.c.l.b16 %v609
    %v775 = vunpack.c.h.b16 %v609
    %v776 = vunpack.c.l.b16 %v610
    %v777 = vunpack.c.h.b16 %v610
    %v778 = vunpack.c.l.b16 %v611
    %v779 = vunpack.c.h.b16 %v611
    %v780 = vunpack.c.l.b16 %v612
    %v781 = vunpack.c.h.b16 %v612
    %v782 = vunpack.c.l.b16 %v613
    %v783 = vunpack.c.h.b16 %v613
    %v784 = vunpack.c.l.b16 %v614
    %v785 = vunpack.c.h.b16 %v614
    %v786 = vunpack.c.l.b16 %v615
    %v787 = vunpack.c.h.b16 %v615
    %v788 = vunpack.c.l.b16 %v616
    %v789 = vunpack.c.h.b16 %v616
    %v790 = vunpack.c.l.b16 %v617
    %v791 = vunpack.c.h.b16 %v617
    %v792 = vunpack.c.l.b16 %v618
    %v793 = vunpack.c.h.b16 %v618
    %v794 = vunpack.c.l.b16 %v619
    %v795 = vunpack.c.h.b16 %v619
    %v796 = vunpack.c.l.b16 %v620
    %v797 = vunpack.c.h.b16 %v620
    %v798 = vunpack.c.l.b16 %v621
    %v799 = vunpack.c.h.b16 %v621
    %v800 = vunpack.c.l.b16 %v622
    %v801 = vunpack.c.h.b16 %v622
    %v802 = vunpack.c.l.b16 %v623
    %v803 = vunpack.c.h.b16 %v623
    %v804 = vunpack.c.l.b16 %v624
    %v805 = vunpack.c.h.b16 %v624
    %v806 = vunpack.c.l.b16 %v625
    %v807 = vunpack.c.h.b16 %v625
    %v808 = vunpack.c.l.b16 %v626
    %v809 = vunpack.c.h.b16 %v626
    %v810 = vunpack.c.l.b16 %v627
    %v811 = vunpack.c.h.b16 %v627
    %v812 = vunpack.c.l.b16 %v628
    %v813 = vunpack.c.h.b16 %v628
    %v814 = vunpack.c.l.b16 %v629
    %v815 = vunpack.c.h.b16 %v629
    %v816 = vunpack.c.l.b16 %v630
    %v817 = vunpack.c.h.b16 %v630
    %v818 = vunpack.c.l.b16 %v631
    %v819 = vunpack.c.h.b16 %v631
    %v820 = vunpack.c.l.b16 %v632
    %v821 = vunpack.c.h.b16 %v632
    %v822 = vunpack.c.l.b16 %v633
    %v823 = vunpack.c.h.b16 %v633
    %v824 = vunpack.c.l.b16 %v634
    %v825 = vunpack.c.h.b16 %v634
    %v826 = vunpack.c.l.b16 %v635
    %v827 = vunpack.c.h.b16 %v635
    %v828 = vunpack.c.l.b16 %v636
    %v829 = vunpack.c.h.b16 %v636
    %v830 = vunpack.c.l.b16 %v637
    %v831 = vunpack.c.h.b16 %v637
    %v832 = vunpack.c.l.b16 %v638
    %v833 = vunpack.c.h.b16 %v638
    %v834 = vunpack.c.l.b16 %v639
    %v835 = vunpack.c.h.b16 %v639
    %v836 = vunpack.c.l.b16 %v640
    %v837 = vunpack.c.h.b16 %v640
    %v838 = vunpack.c.l.b16 %v641
    %v839 = vunpack.c.h.b16 %v641
    %v840 = vunpack.c.l.b16 %v642
    %v841 = vunpack.c.h.b16 %v642
    %v842 = vunpack.c.l.b16 %v643
    %v843 = vunpack.c.h.b16 %v643
    %v844 = vunpack.c.l.b16 %v644
    %v845 = vunpack.c.h.b16 %v644
    %v846 = vunpack.c.l.b16 %v645
    %v847 = vunpack.c.h.b16 %v645
    %v848 = vunpack.c.l.b16 %v646
    %v849 = vunpack.c.h.b16 %v646
    %v850 = vpack.c.b16 %v724, %v722
    %v851 = vpack.c.b16 %v725, %v723
    %v852 = vpack.c.b16 %v728, %v726
    %v853 = vpack.c.b16 %v729, %v727
    %v854 = vpack.c.b16 %v732, %v730
    %v855 = vpack.c.b16 %v733, %v731
    %v856 = vpack.c.b16 %v736, %v734
    %v857 = vpack.c.b16 %v737, %v735
    %v858 = vpack.c.b16 %v740, %v738
    %v859 = vpack.c.b16 %v741, %v739
    %v860 = vpack.c.b16 %v744, %v742
    %v861 = vpack.c.b16 %v745, %v743
    %v862 = vpack.c.b16 %v748, %v746
    %v863 = vpack.c.b16 %v749, %v747
    %v864 = vpack.c.b16 %v752, %v750
    %v865 = vpack.c.b16 %v753, %v751
    %v866 = vpack.c.b16 %v756, %v754
    %v867 = vpack.c.b16 %v757, %v755
    %v868 = vpack.c.b16 %v760, %v758
    %v869 = vpack.c.b16 %v761, %v759
    %v870 = vpack.c.b16 %v764, %v762
    %v871 = vpack.c.b16 %v765, %v763
    %v872 = vpack.c.b16 %v768, %v766
    %v873 = vpack.c.b16 %v769, %v767
    %v874 = vpack.c.b16 %v772, %v770
    %v875 = vpack.c.b16 %v773, %v771
    %v876 = vpack.c.b16 %v776, %v774
    %v877 = vpack.c.b16 %v777, %v775
    %v878 = vpack.c.b16 %v780, %v778
    %v879 = vpack.c.b16 %v781, %v779
    %v880 = vpack.c.b16 %v784, %v782
    %v881 = vpack.c.b16 %v785, %v783
    %v882 = vpack.c.b16 %v788, %v786
    %v883 = vpack.c.b16 %v789, %v787
    %v884 = vpack.c.b16 %v792, %v790
    %v885 = vpack.c.b16 %v793, %v791
    %v886 = vpack.c.b16 %v796, %v794
    %v887 = vpack.c.b16 %v797, %v795
    %v888 = vpack.c.b16 %v800, %v798
    %v889 = vpack.c.b16 %v801, %v799
    %v890 = vpack.c.b16 %v804, %v802
    %v891 = vpack.c.b16 %v805, %v803
    %v892 = vpack.c.b16 %v808, %v806
    %v893 = vpack.c.b16 %v809, %v807
    %v894 = vpack.c.b16 %v812, %v810
    %v895 = vpack.c.b16 %v813, %v811
    %v896 = vpack.c.b16 %v816, %v814
    %v897 = vpack.c.b16 %v817, %v815
    %v898 = vpack.c.b16 %v820, %v818
    %v899 = vpack.c.b16 %v821, %v819
    %v900 = vpack.c.b16 %v824, %v822
    %v901 = vpack.c.b16 %v825, %v823
    %v902 = vpack.c.b16 %v828, %v826
    %v903 = vpack.c.b16 %v829, %v827
    %v904 = vpack.c.b16 %v832, %v830
    %v905 = vpack.c.b16 %v833, %v831
    %v906 = vpack.c.b16 %v836, %v834
    %v907 = vpack.c.b16 %v837, %v835
    %v908 = vpack.c.b16 %v840, %v838
    %v909 = vpack.c.b16 %v841, %v839
    %v910 = vpack.c.b16 %v844, %v842
    %v911 = vpack.c.b16 %v845, %v843
    %v912 = vpack.c.b16 %v848, %v846
    %v913 = vpack.c.b16 %v849, %v847
    %978 = vmatprep.subr.bf16.mxu0 %v865
    %979 = vmatpush1.bf16.msra.mxu0 %v864
    %980 = vmatprep.subr.bf16.mxu0 %v863
    %981 = vmatpush1.bf16.msra.mxu0 %v862
    %982 = vmatprep.subr.bf16.mxu0 %v861
    %983 = vmatpush1.bf16.msra.mxu0 %v860
    %984 = vmatprep.subr.bf16.mxu0 %v859
    %985 = vmatpush1.bf16.msra.mxu0 %v858
    %986 = vmatprep.subr.bf16.mxu0 %v857
    %987 = vmatpush1.bf16.msra.mxu0 %v856
    %988 = vmatprep.subr.bf16.mxu0 %v855
    %989 = vmatpush1.bf16.msra.mxu0 %v854
    %990 = vmatprep.subr.bf16.mxu0 %v853
    %991 = vmatpush1.bf16.msra.mxu0 %v852
    %992 = vmatprep.subr.bf16.mxu0 %v851
    %993 = vmatpush1.bf16.msra.mxu0 %v850
    %994 = vmatprep.subr.bf16.mxu0 %v881
    %995 = vmatpush2.bf16.msra.mxu0 %v880
    %996 = vmatprep.subr.bf16.mxu0 %v879
    %997 = vmatpush2.bf16.msra.mxu0 %v878
    %998 = vmatprep.subr.bf16.mxu0 %v877
    %999 = vmatpush2.bf16.msra.mxu0 %v876
    %1000 = vmatprep.subr.bf16.mxu0 %v875
    %1001 = vmatpush2.bf16.msra.mxu0 %v874
    %1002 = vmatprep.subr.bf16.mxu0 %v873
    %1003 = vmatpush2.bf16.msra.mxu0 %v872
    %1004 = vmatprep.subr.bf16.mxu0 %v871
    %1005 = vmatpush2.bf16.msra.mxu0 %v870
    %1006 = vmatprep.subr.bf16.mxu0 %v869
    %1007 = vmatpush2.bf16.msra.mxu0 %v868
    %1008 = vmatprep.subr.bf16.mxu0 %v867
    %1009 = vmatpush2.bf16.msra.mxu0 %v866
    %1010 = vmatprep.mubr.bf16.mxu0 %v580
    %1011 = vmatmul.mubr.bf16.gmra.mxu0 %v579
    %v1012 = vpop.f32.mrf.mxu0
    %v1013 = vadd.f32 %v651, %v1012
    %v1014 = vpop.f32.mrf.mxu0
    %v1015 = vadd.f32 %v655, %v1014
    %v1016 = vpop.f32.mrf.mxu0
    %v1017 = vpop.f32.mrf.mxu0
    %1018 = vdwg.mxu0
    %1019 = vmatprep.subr.bf16.mxu0 %v897
    %1020 = vmatpush1.bf16.msra.mxu0 %v896
    %1021 = vmatprep.subr.bf16.mxu0 %v895
    %1022 = vmatpush1.bf16.msra.mxu0 %v894
    %1023 = vmatprep.subr.bf16.mxu0 %v893
    %1024 = vmatpush1.bf16.msra.mxu0 %v892
    %1025 = vmatprep.subr.bf16.mxu0 %v891
    %1026 = vmatpush1.bf16.msra.mxu0 %v890
    %1027 = vmatprep.subr.bf16.mxu0 %v889
    %1028 = vmatpush1.bf16.msra.mxu0 %v888
    %1029 = vmatprep.subr.bf16.mxu0 %v887
    %1030 = vmatpush1.bf16.msra.mxu0 %v886
    %1031 = vmatprep.subr.bf16.mxu0 %v885
    %1032 = vmatpush1.bf16.msra.mxu0 %v884
    %1033 = vmatprep.subr.bf16.mxu0 %v883
    %1034 = vmatpush1.bf16.msra.mxu0 %v882
    %1035 = vmatprep.subr.bf16.mxu0 %v913
    %1036 = vmatpush2.bf16.msra.mxu0 %v912
    %1037 = vmatprep.subr.bf16.mxu0 %v911
    %1038 = vmatpush2.bf16.msra.mxu0 %v910
    %1039 = vmatprep.subr.bf16.mxu0 %v909
    %1040 = vmatpush2.bf16.msra.mxu0 %v908
    %1041 = vmatprep.subr.bf16.mxu0 %v907
    %1042 = vmatpush2.bf16.msra.mxu0 %v906
    %1043 = vmatprep.subr.bf16.mxu0 %v905
    %1044 = vmatpush2.bf16.msra.mxu0 %v904
    %1045 = vmatprep.subr.bf16.mxu0 %v903
    %1046 = vmatpush2.bf16.msra.mxu0 %v902
    %1047 = vmatprep.subr.bf16.mxu0 %v901
    %1048 = vmatpush2.bf16.msra.mxu0 %v900
    %1049 = vmatprep.subr.bf16.mxu0 %v899
    %1050 = vmatpush2.bf16.msra.mxu0 %v898
    %1051 = vmatprep.mubr.bf16.mxu0 %v582
    %1052 = vmatmul.mubr.bf16.gmra.mxu0 %v581
    %v1053 = vpop.f32.mrf.mxu0
    %v1054 = vadd.f32 %v1013, %v1053
    %v1055 = vpop.f32.mrf.mxu0
    %v1056 = vadd.f32 %v1015, %v1055
    %v1057 = vpop.f32.mrf.mxu0
    %v1058 = vpop.f32.mrf.mxu0
    %1059 = vdwg.mxu0
    %v1060 = vmax.f32 %v1054, 0.0
    %v1061 = vmax.f32 %v1056, 0.0
    %v1062 = vpack.c.bf16 %v1060, %v1060
    %v1063 = vpack.c.bf16 %v1061, %v1061
    %v1064 = vld [vmem:[#allocation9] sm:$0xf]
    %v1065 = vld [vmem:[#allocation9 + $0x4] sm:$0xf]
    %v1066 = vld [vmem:[#allocation9 + $0x8] sm:$0xf]
    %v1067 = vld [vmem:[#allocation9 + $0xc] sm:$0xf]
    %v1068 = vld [vmem:[#allocation9 + $0x10] sm:$0xf]
    %v1069 = vld [vmem:[#allocation9 + $0x14] sm:$0xf]
    %v1070 = vld [vmem:[#allocation9 + $0x18] sm:$0xf]
    %v1071 = vld [vmem:[#allocation9 + $0x1c] sm:$0xf]
    %v1072 = vld [vmem:[#allocation9 + $0x20] sm:$0xf]
    %v1073 = vld [vmem:[#allocation9 + $0x24] sm:$0xf]
    %v1074 = vld [vmem:[#allocation9 + $0x28] sm:$0xf]
    %v1075 = vld [vmem:[#allocation9 + $0x2c] sm:$0xf]
    %v1076 = vld [vmem:[#allocation9 + $0x30] sm:$0xf]
    %v1077 = vld [vmem:[#allocation9 + $0x34] sm:$0xf]
    %v1078 = vld [vmem:[#allocation9 + $0x38] sm:$0xf]
    %v1079 = vld [vmem:[#allocation9 + $0x3c] sm:$0xf]
    %v1080 = vld [vmem:[#allocation9 + $0x40] sm:$0xf]
    %v1081 = vld [vmem:[#allocation9 + $0x44] sm:$0xf]
    %v1082 = vld [vmem:[#allocation9 + $0x48] sm:$0xf]
    %v1083 = vld [vmem:[#allocation9 + $0x4c] sm:$0xf]
    %v1084 = vld [vmem:[#allocation9 + $0x50] sm:$0xf]
    %v1085 = vld [vmem:[#allocation9 + $0x54] sm:$0xf]
    %v1086 = vld [vmem:[#allocation9 + $0x58] sm:$0xf]
    %v1087 = vld [vmem:[#allocation9 + $0x5c] sm:$0xf]
    %v1088 = vld [vmem:[#allocation9 + $0x60] sm:$0xf]
    %v1089 = vld [vmem:[#allocation9 + $0x64] sm:$0xf]
    %v1090 = vld [vmem:[#allocation9 + $0x68] sm:$0xf]
    %v1091 = vld [vmem:[#allocation9 + $0x6c] sm:$0xf]
    %v1092 = vld [vmem:[#allocation9 + $0x70] sm:$0xf]
    %v1093 = vld [vmem:[#allocation9 + $0x74] sm:$0xf]
    %v1094 = vld [vmem:[#allocation9 + $0x78] sm:$0xf]
    %v1095 = vld [vmem:[#allocation9 + $0x7c] sm:$0xf]
    %v1097 = vlaneseq
    %v1098 = vshrl.u32 %v1097, 7
    %v1099 = vsub.s32 0, %v1098
    %v1100 = vrot.slane %v87, %v1099
    %v1134 = vunpack.c.l.b16 %v1064
    %v1135 = vunpack.c.l.b16 %v1065
    %v1136 = vunpack.c.l.b16 %v1066
    %v1137 = vunpack.c.l.b16 %v1067
    %v1138 = vunpack.c.l.b16 %v1068
    %v1139 = vunpack.c.l.b16 %v1069
    %v1140 = vunpack.c.l.b16 %v1070
    %v1141 = vunpack.c.l.b16 %v1071
    %v1142 = vunpack.c.l.b16 %v1072
    %v1143 = vunpack.c.l.b16 %v1073
    %v1144 = vunpack.c.l.b16 %v1074
    %v1145 = vunpack.c.l.b16 %v1075
    %v1146 = vunpack.c.l.b16 %v1076
    %v1147 = vunpack.c.l.b16 %v1077
    %v1148 = vunpack.c.l.b16 %v1078
    %v1149 = vunpack.c.l.b16 %v1079
    %v1150 = vunpack.c.l.b16 %v1080
    %v1151 = vunpack.c.l.b16 %v1081
    %v1152 = vunpack.c.l.b16 %v1082
    %v1153 = vunpack.c.l.b16 %v1083
    %v1154 = vunpack.c.l.b16 %v1084
    %v1155 = vunpack.c.l.b16 %v1085
    %v1156 = vunpack.c.l.b16 %v1086
    %v1157 = vunpack.c.l.b16 %v1087
    %v1158 = vunpack.c.l.b16 %v1088
    %v1159 = vunpack.c.l.b16 %v1089
    %v1160 = vunpack.c.l.b16 %v1090
    %v1161 = vunpack.c.l.b16 %v1091
    %v1162 = vunpack.c.l.b16 %v1092
    %v1163 = vunpack.c.l.b16 %v1093
    %v1164 = vunpack.c.l.b16 %v1094
    %v1165 = vunpack.c.l.b16 %v1095
    %v1166 = vpack.c.b16 %v1135, %v1134
    %v1167 = vpack.c.b16 %v1137, %v1136
    %v1168 = vpack.c.b16 %v1139, %v1138
    %v1169 = vpack.c.b16 %v1141, %v1140
    %v1170 = vpack.c.b16 %v1143, %v1142
    %v1171 = vpack.c.b16 %v1145, %v1144
    %v1172 = vpack.c.b16 %v1147, %v1146
    %v1173 = vpack.c.b16 %v1149, %v1148
    %v1174 = vpack.c.b16 %v1151, %v1150
    %v1175 = vpack.c.b16 %v1153, %v1152
    %v1176 = vpack.c.b16 %v1155, %v1154
    %v1177 = vpack.c.b16 %v1157, %v1156
    %v1178 = vpack.c.b16 %v1159, %v1158
    %v1179 = vpack.c.b16 %v1161, %v1160
    %v1180 = vpack.c.b16 %v1163, %v1162
    %v1181 = vpack.c.b16 %v1165, %v1164
    %1198 = vmatprep.subr.bf16.mxu0 0
    %1199 = vmatpush1.bf16.msra.mxu0 %v1173
    %1200 = vmatprep.subr.bf16.mxu0 0
    %1201 = vmatpush1.bf16.msra.mxu0 %v1172
    %1202 = vmatprep.subr.bf16.mxu0 0
    %1203 = vmatpush1.bf16.msra.mxu0 %v1171
    %1204 = vmatprep.subr.bf16.mxu0 0
    %1205 = vmatpush1.bf16.msra.mxu0 %v1170
    %1206 = vmatprep.subr.bf16.mxu0 0
    %1207 = vmatpush1.bf16.msra.mxu0 %v1169
    %1208 = vmatprep.subr.bf16.mxu0 0
    %1209 = vmatpush1.bf16.msra.mxu0 %v1168
    %1210 = vmatprep.subr.bf16.mxu0 0
    %1211 = vmatpush1.bf16.msra.mxu0 %v1167
    %1212 = vmatprep.subr.bf16.mxu0 0
    %1213 = vmatpush1.bf16.msra.mxu0 %v1166
    %1214 = vmatprep.subr.bf16.mxu0 0
    %1215 = vmatpush2.bf16.msra.mxu0 %v1181
    %1216 = vmatprep.subr.bf16.mxu0 0
    %1217 = vmatpush2.bf16.msra.mxu0 %v1180
    %1218 = vmatprep.subr.bf16.mxu0 0
    %1219 = vmatpush2.bf16.msra.mxu0 %v1179
    %1220 = vmatprep.subr.bf16.mxu0 0
    %1221 = vmatpush2.bf16.msra.mxu0 %v1178
    %1222 = vmatprep.subr.bf16.mxu0 0
    %1223 = vmatpush2.bf16.msra.mxu0 %v1177
    %1224 = vmatprep.subr.bf16.mxu0 0
    %1225 = vmatpush2.bf16.msra.mxu0 %v1176
    %1226 = vmatprep.subr.bf16.mxu0 0
    %1227 = vmatpush2.bf16.msra.mxu0 %v1175
    %1228 = vmatprep.subr.bf16.mxu0 0
    %1229 = vmatpush2.bf16.msra.mxu0 %v1174
    %1230 = vmatprep.mubr.bf16.mxu0 %v1063
    %1231 = vmatmul.mubr.bf16.gmra.mxu0 %v1062
    %v1232 = vpop.f32.mrf.mxu0
    %v1233 = vadd.f32 %v1100, %v1232
    %v1234 = vpop.f32.mrf.mxu0
    %v1235 = vpop.f32.mrf.mxu0
    %v1236 = vpop.f32.mrf.mxu0
    %1237 = vdwg.mxu0
    %v1238 = vlaneseq
    %v1239 = vand.u32 %v1238, 127
    %vm1240 = vcmp.lt.s32.totalorder %v1239, 10
    %v1241 = vsel %vm1240, %v1233, -1e+30
    %1242 = vmax.xlane.f32.xlu0 %v1241
    %v1243 = vpop.xlane.xlu0 %1242
    %v1244 = vsub.f32 %v1241, %v1243
    %v1245 = vmul.f32 %v1244, 1.442695
    %v1246 = vpow.pop %v1245
    %1247 = vadd.xlane.f32.xlu0 %v1246
    %v1248 = vpop.xlane.xlu0 %1247
    %v1249 = vrcp.pop %v1248
    %v1250 = vmul.f32 %v1246, %v1249
    %v1251 = vpack.c.bf16 %v1250, %v1250
    %1252 = vst [vmem:[#allocation11] sm:$0xf] %v1251
    %v1253 = vsel %vm1240, %v1250, -1e+30
    %1254 = vmax.xlane.f32.xlu0 %v1253
    %v1255 = vpop.xlane.xlu0 %1254
    %v1256 = vsub.f32 %v1253, %v1255
    %v1257 = vmul.f32 %v1256, 1.442695
    %v1258 = vpow.pop %v1257
    %1259 = vadd.xlane.f32.xlu0 %v1258
    %v1260 = vpop.xlane.xlu0 %1259
    %v1261 = vlog2.pop %v1260
    %v1262 = vmul.f32 %v1261, 0.6931472
    %v1263 = vadd.f32 %v1262, %v1255
    %v1264 = vld [vmem:[%s1] sm:$0xff]
    %1265 = vset.pattern.permute.xlu0 0
    %1266 = vperm.xlu0 %1265, %v1264
    %v1267 = vpop.permute.xlu0 %1266
    %vm1268 = vcmp.eq.s32.totalorder %v1239, %v1267
    %v1269 = vsel %vm1268, 1, 0
    %v1270 = vcvt.s32.f32 %v1269
    %v1271 = vsub.f32 %v1253, %v1263
    %v1272 = vmul.f32 %v1270, %v1271
    %1273 = vadd.xlane.f32.xlu0 %v1272
    %v1274 = vpop.xlane.xlu0 %1273
    %s1275 = smul.u32 0, 8
    %v1276 = vlaneseq
    %v1277 = vshrl.u32 %v1276, 7
    %v1278 = vstv %s1275
    %v1279 = vadd.s32 %v1278, %v1277
    %vm1280 = vcmp.lt.s32.totalorder %v1279, 8
    %v1281 = vsel %vm1280, 1, 0
    %v1282 = vcvt.s32.f32 %v1281
    %v1283 = vsub.f32 0.0, %v1274
    %v1284 = vmul.f32 %v1283, %v1282
    %vm1285 = vcmask 7168
    %v1286 = vsel %vm1285, %v1284, 0.0
    %1287 = vadd.xlane.f32.xlu0 %v1286
    %v1288 = vpop.xlane.xlu0 %1287
    %v1289 = vrot.slane %v1288, 4
    %v1290 = vadd.f32 %v1288, %v1289
    %v1291 = vrot.slane %v1290, 2
    %v1292 = vadd.f32 %v1290, %v1291
    %v1293 = vrot.slane %v1292, 1
    %v1294 = vadd.f32 %v1292, %v1293
    %s1295 = vtos %v1294
    %s1296 = scalar_lea.smem [#allocation12], 0
    %1297 = sst [smem:[%s1296]] %s1295
    // Predicated region
    $region42: #{tpu_custom_call.1} parent=1 // pred_check
      _
    $region43: #{tpu_custom_call.1} parent=1 // pred_check_branch
      %1299 = sbr.rel (0) target = $region45
    $region44: #{tpu_custom_call.1} parent=1 // pred_region
      %s1301 = ssub.s32 64, 64
      %1302 = vsyncadd [#allocation4], %s1301
      %s1304 = sshll.u32 [#allocation11], 4
      %s1305 = int_to_ptr.vmem [resolvable:$true] %s1304
      %1307 = dma.vmem_to_hbm [thread:$0]  %s1305, 64, %s6, [#allocation4]
    $region45: #{tpu_custom_call.1} parent=1 // pred_fallthru
      _
    // Predicated region
    $region46: #{tpu_custom_call.1} parent=1 // pred_check
      _
    $region47: #{tpu_custom_call.1} parent=1 // pred_check_branch
      %1309 = sbr.rel (0) target = $region49
    $region48: #{tpu_custom_call.1} parent=1 // pred_region
      %s1311 = ssub.s32 16, 16
      %1312 = vsyncadd [#allocation5], %s1311
      %1315 = dma.smem_to_hbm [#allocation12], 16, %s7, [#allocation5]
    $region49: #{tpu_custom_call.1} parent=1 // pred_fallthru
      _
    // Predicated region
    $region50: #{tpu_custom_call.1} parent=1 // pred_check
      _
    $region51: #{tpu_custom_call.1} parent=1 // pred_check_branch
      %1317 = sbr.rel (0) target = $region53
    $region52: #{tpu_custom_call.1} parent=1 // pred_region
      %1318 = dma.done [#allocation4], 64
    $region53: #{tpu_custom_call.1} parent=1 // pred_fallthru
      _
    // Predicated region
    $region54: #{tpu_custom_call.1} parent=1 // pred_check
      _
    $region55: #{tpu_custom_call.1} parent=1 // pred_check_branch
      %1320 = sbr.rel (0) target = $region57
    $region56: #{tpu_custom_call.1} parent=1 // pred_region
      %1321 = dma.done [#allocation5], 16
    $region57: #{tpu_custom_call.1} parent=1 // pred_fallthru
      _
    %1322 = sfence
    %1323 = vsyncpa [#allocation3], 1
    %1324 = vsyncpa [#allocation7], 1
    %1325 = vsyncpa [#allocation10], 1
    %1326 = vsyncpa [#allocation4], 1
    %1327 = vsyncpa [#allocation5], 1

</llo_original>
